<compile_context>
chip_gen: v7x
topology: tpu7x:2x2x1
jax: 0.10.0
libtpu: 0.0.40
codegen_flags: <defaults>
</compile_context>

<pallas_src>
import jax
import jax.numpy as jnp
from jax.experimental import pallas as pl
from jax.experimental.pallas import tpu as pltpu

LANE = 128        # lane-dense padded output width (real out_features = 1)
SUBLANE = 8
_MAX_TM = 512     # target batch tile (measured ~85% of HBM roofline)
_MAX_TK = 2048    # cap on the K tile
_VMEM_BUDGET = 30 << 20   # pipeline-buffer budget, under the 32 MiB we request


def _round_up(x, m):
    return (x + m - 1) // m * m


def _pick_tiles(batch, k):
    """Choose (tm, tk) so double-buffered tiles fit the VMEM budget."""
    # K tile: full K when small or not 128-aligned; else the largest
    # 128-multiple divisor of K capped at _MAX_TK (keeps kt = k // tk exact).
    if k % LANE != 0 or k <= _MAX_TK:
        tk = k
    else:
        tk = LANE
        for cand in range(LANE, _MAX_TK + 1, LANE):
            if k % cand == 0:
                tk = cand

    tm = min(_MAX_TM, _round_up(batch, SUBLANE))

    def vmem_bytes(tm_, tk_):
        x_buf = 2 * tm_ * tk_ * 4        # double-buffered f32 x tile
        w_buf = 2 * tk_ * LANE * 2       # double-buffered bf16 weight slab
        o_buf = 2 * tm_ * LANE * 2       # double-buffered bf16 out tile
        acc = tm_ * LANE * 4             # f32 accumulator scratch
        bias = 2 * LANE * 4
        return x_buf + w_buf + o_buf + acc + bias

    while tm > SUBLANE and vmem_bytes(tm, tk) > _VMEM_BUDGET:
        tm = max(SUBLANE, _round_up(tm // 2, SUBLANE))
    return tm, tk


def _dis_score_kernel(x_ref, w_ref, b_ref, out_ref, acc_ref):
    """One (batch tile, K tile) step of y = x @ W + b.

    W is a bf16 (tk, 128) slab whose only real column is 0; bias is f32
    (1, 128) with the same layout.  Accumulation is f32 in VMEM scratch.
    """
    kk = pl.program_id(1)

    @pl.when(kk == 0)
    def _init():
        acc_ref[...] = jnp.zeros_like(acc_ref)

    # bf16 at the MXU boundary (hidden under DMA slack), f32 accumulate.
    x = x_ref[...].astype(jnp.bfloat16)                       # (tm, tk)
    acc_ref[...] += jnp.dot(x, w_ref[...],
                            preferred_element_type=jnp.float32)  # (tm, LANE)

    @pl.when(kk == pl.num_programs(1) - 1)
    def _finalize():
        out_ref[...] = (acc_ref[...] + b_ref[...]).astype(out_ref.dtype)


def make_dis_score_slabs(weight, bias):
    """Precompute lane-dense weight/bias slabs from PyTorch Linear params.

    weight: (1, 2H) f32, bias: (1,) f32  ->  (2H, 128) bf16, (1, 128) f32.
    Columns 1..127 are exactly zero (only column 0 is ever read back).
    """
    (out_f, k) = weight.shape
    assert out_f == 1 and bias.shape == (1,)
    w_slab = (jnp.zeros((k, LANE), jnp.bfloat16)
              .at[:, 0].set(weight[0].astype(jnp.bfloat16)))
    b_slab = jnp.zeros((1, LANE), jnp.float32).at[0, 0].set(bias[0])
    return w_slab, b_slab


def dis_score_forward(x, w_slab, b_slab):
    """Pallas forward of Dis_score: y = x @ W + b, returns (B, 1) f32.

    x: (B, 2H); w_slab: (2H, 128) bf16 slab; b_slab: (1, 128) f32 slab.
    """
    batch, k = x.shape
    assert w_slab.shape == (k, LANE) and b_slab.shape == (1, LANE)

    tm, tk = _pick_tiles(batch, k)
    bt = pl.cdiv(batch, tm)
    kt = k // tk                     # tk always divides k (or equals it)

    cost = pl.CostEstimate(
        flops=2 * batch * k,
        transcendentals=0,
        bytes_accessed=(x.size * x.dtype.itemsize
                        + w_slab.size * 2          # bf16 weight slab
                        + batch * LANE * 2))       # bf16 output writeback

    out = pl.pallas_call(
        _dis_score_kernel,
        out_shape=jax.ShapeDtypeStruct((batch, LANE), jnp.bfloat16),
        grid=(bt, kt),
        in_specs=[
            pl.BlockSpec((tm, tk), lambda i, j: (i, j)),     # x: (batch, K) tiles
            pl.BlockSpec((tk, LANE), lambda i, j: (j, 0)),   # weight slab (bf16)
            pl.BlockSpec((1, LANE), lambda i, j: (0, 0)),    # bias slab (resident)
        ],
        out_specs=pl.BlockSpec((tm, LANE), lambda i, j: (i, 0)),  # lane-dense store
        scratch_shapes=[pltpu.VMEM((tm, LANE), jnp.float32)],     # f32 accumulator
        compiler_params=pltpu.CompilerParams(
            dimension_semantics=("parallel", "arbitrary"),
            vmem_limit_bytes=32 << 20),
        cost_estimate=cost,
    )(x, w_slab, b_slab)

    # Strip lane padding; cast the narrow (B,1) slice back to f32 (cheap).
    return out[:batch, :1].astype(jnp.float32)


class DisScorePallas:
    """JAX/Pallas port of Dis_score (single Linear(2*hid_dim, 1))."""

    def __init__(self, key, hid_dim):
        in_dim = 2 * hid_dim
        k_w, k_b = jax.random.split(key)
        bound = 1.0 / float(jnp.sqrt(in_dim))   # PyTorch Linear default init range
        self.weight = jax.random.uniform(k_w, (1, in_dim), jnp.float32, -bound, bound)
        self.bias = jax.random.uniform(k_b, (1,), jnp.float32, -bound, bound)
        # Lane-dense slabs built once (not per forward call).
        self.w_slab, self.b_slab = make_dis_score_slabs(self.weight, self.bias)

    def forward(self, x):
        return dis_score_forward(x, self.w_slab, self.b_slab)


def _reference(x, weight, bias):
    return x @ weight.T + bias


if __name__ == "__main__":
    key = jax.random.PRNGKey(0)
    k_model, k_x1, k_x2 = jax.random.split(key, 3)

    hid_dim = 32          # -> in_features = 2 * hid_dim = 64
    batch = 4

    model = DisScorePallas(k_model, hid_dim)

    # Primary small case.
    x = jax.random.normal(k_x1, (batch, 2 * hid_dim), jnp.float32)
    y = jax.block_until_ready(model.forward(x))
    y_ref = _reference(x, model.weight, model.bias)
    assert y.shape == (batch, 1), f"bad output shape {y.shape}"
    # bf16 MXU inputs + bf16 writeback with f32 accumulate -> loosened tolerance.
    assert jnp.allclose(y, y_ref, atol=5e-2, rtol=5e-2), "Dis_score mismatch"

    # Secondary case exercising a partial trailing batch block (no padding copy).
    batch2 = 37
    x2 = jax.random.normal(k_x2, (batch2, 2 * hid_dim), jnp.float32)
    y2 = jax.block_until_ready(model.forward(x2))
    y2_ref = _reference(x2, model.weight, model.bias)
    assert y2.shape == (batch2, 1), f"bad output shape {y2.shape}"
    assert jnp.allclose(y2, y2_ref, atol=5e-2, rtol=5e-2), "Dis_score mismatch (partial block)"

    print("KERNEL_OK")
</pallas_src>

<mosaic_0001>
module attributes {stable_mosaic.version = 11 : i64} {
  func.func @_dis_score_kernel(%arg0: i32, %arg1: i32, %arg2: memref<8x64xf32, #tpu.memory_space<vmem>>, %arg3: memref<64x128xbf16, #tpu.memory_space<vmem>>, %arg4: memref<1x128xf32, #tpu.memory_space<vmem>>, %arg5: memref<8x128xbf16, #tpu.memory_space<vmem>>, %arg6: memref<8x128xf32, #tpu.memory_space<vmem>>) attributes {dimension_semantics = [#tpu.dimension_semantics<parallel>, #tpu.dimension_semantics<arbitrary>], iteration_bounds = array<i64: 1, 1>, scalar_prefetch = 0 : i64, scratch_operands = 1 : i64, tpu.core_type = #tpu.core_type<tc>, window_params = [{transform_indices = @transform_0, window_bounds = array<i64: 8, 64>}, {transform_indices = @transform_1, window_bounds = array<i64: 64, 128>}, {pipeline_mode = #tpu.pipeline_mode<synchronous>, transform_indices = @transform_2, window_bounds = array<i64: 1, 128>}, {transform_indices = @transform_3, window_bounds = array<i64: 8, 128>}]} {
    %c0_i32 = arith.constant 0 : i32
    %0 = arith.cmpi eq, %arg1, %c0_i32 : i32
    %1 = arith.extui %0 : i1 to i32
    %c0_i32_0 = arith.constant 0 : i32
    %2 = arith.cmpi ne, %1, %c0_i32_0 : i32
    scf.if %2 {
      %cst_10 = arith.constant 0.000000e+00 : f32
      %13 = vector.broadcast %cst_10 : f32 to vector<8x128xf32>
      %c0_11 = arith.constant 0 : index
      %c0_12 = arith.constant 0 : index
      %14 = vector.load %arg6[%c0_11, %c0_12] : memref<8x128xf32, #tpu.memory_space<vmem>>, vector<8x128xf32>
      tpu.vector_store %arg6[%c0_11, %c0_12], %13 {strides = array<i32>} : memref<8x128xf32, #tpu.memory_space<vmem>>, vector<8x128xf32>,
    } else {
    }
    %c0 = arith.constant 0 : index
    %c0_1 = arith.constant 0 : index
    %3 = vector.load %arg2[%c0, %c0_1] : memref<8x64xf32, #tpu.memory_space<vmem>>, vector<8x64xf32>
    %4 = arith.truncf %3 : vector<8x64xf32> to vector<8x64xbf16>
    %c0_2 = arith.constant 0 : index
    %c0_3 = arith.constant 0 : index
    %5 = vector.load %arg6[%c0_2, %c0_3] : memref<8x128xf32, #tpu.memory_space<vmem>>, vector<8x128xf32>
    %c0_4 = arith.constant 0 : index
    %c0_5 = arith.constant 0 : index
    %6 = vector.load %arg3[%c0_4, %c0_5] : memref<64x128xbf16, #tpu.memory_space<vmem>>, vector<64x128xbf16>
    %cst = arith.constant dense<0.000000e+00> : vector<8x128xf32>
    %7 = tpu.matmul %4, %6, %cst {dimension_numbers = #tpu.dot_dimension_numbers<[1], [0], [0], [1], [0, 0, 1, 1], [], []>} : vector<8x64xbf16>, vector<64x128xbf16>, vector<8x128xf32> -> vector<8x128xf32>
    %8 = arith.addf %5, %7 : vector<8x128xf32>
    %c0_6 = arith.constant 0 : index
    %c0_7 = arith.constant 0 : index
    %9 = vector.load %arg6[%c0_6, %c0_7] : memref<8x128xf32, #tpu.memory_space<vmem>>, vector<8x128xf32>
    tpu.vector_store %arg6[%c0_6, %c0_7], %8 {strides = array<i32>} : memref<8x128xf32, #tpu.memory_space<vmem>>, vector<8x128xf32>,
    %c0_i32_8 = arith.constant 0 : i32
    %10 = arith.cmpi eq, %arg1, %c0_i32_8 : i32
    %11 = arith.extui %10 : i1 to i32
    %c0_i32_9 = arith.constant 0 : i32
    %12 = arith.cmpi ne, %11, %c0_i32_9 : i32
    scf.if %12 {
      %c0_10 = arith.constant 0 : index
      %c0_11 = arith.constant 0 : index
      %13 = vector.load %arg6[%c0_10, %c0_11] : memref<8x128xf32, #tpu.memory_space<vmem>>, vector<8x128xf32>
      %c0_12 = arith.constant 0 : index
      %c0_13 = arith.constant 0 : index
      %14 = vector.load %arg4[%c0_12, %c0_13] : memref<1x128xf32, #tpu.memory_space<vmem>>, vector<1x128xf32>
      %15 = vector.broadcast %14 : vector<1x128xf32> to vector<8x128xf32>
      %16 = arith.addf %13, %15 : vector<8x128xf32>
      %17 = arith.truncf %16 : vector<8x128xf32> to vector<8x128xbf16>
      %c0_14 = arith.constant 0 : index
      %c0_15 = arith.constant 0 : index
      %18 = vector.load %arg5[%c0_14, %c0_15] : memref<8x128xbf16, #tpu.memory_space<vmem>>, vector<8x128xbf16>
      tpu.vector_store %arg5[%c0_14, %c0_15], %17 {strides = array<i32>} : memref<8x128xbf16, #tpu.memory_space<vmem>>, vector<8x128xbf16>,
    } else {
    }
    return
  }
  func.func @transform_0(%arg0: i32, %arg1: i32) -> (i32, i32) {
    %c0_i32 = arith.constant 0 : i32
    return %arg0, %arg1 : i32, i32
  }
  func.func @transform_1(%arg0: i32, %arg1: i32) -> (i32, i32) {
    %c0_i32 = arith.constant 0 : i32
    %c0_i32_0 = arith.constant 0 : i32
    return %arg1, %c0_i32 : i32, i32
  }
  func.func @transform_2(%arg0: i32, %arg1: i32) -> (i32, i32) {
    %c0_i32 = arith.constant 0 : i32
    %c0_i32_0 = arith.constant 0 : i32
    %c0_i32_1 = arith.constant 0 : i32
    return %c0_i32, %c0_i32_0 : i32, i32
  }
  func.func @transform_3(%arg0: i32, %arg1: i32) -> (i32, i32) {
    %c0_i32 = arith.constant 0 : i32
    %c0_i32_0 = arith.constant 0 : i32
    return %arg0, %c0_i32 : i32, i32
  }
}

</mosaic_0001>

<llo_original>
// kernel: tpu_custom_call.1
$region0: #{tpu_custom_call.1}
  #allocation0 [shape = 'u32[]', space=smem, size = 0x4, offset = 0x4, fixed_abs, tag = 'smem constant byte address 0x4 - core index']
  #allocation1 [shape = 'u32[144,128]{1,0:T(1,128)}', space=vmem, size = 0x12000, scoped, tag = 'internal scratch']
  #allocation2 [shape = 'f32[8,128]{1,0:T(8,128)}', space=vmem, size = 0x1000, scoped, tag = 'scratch operand']
  %s0 = inlined_call_operand.hbm [shape: f32[4,64], index: 0, kind: input, shape index: {}]
  %s1 = inlined_call_operand.hbm [shape: bf16[64,128], index: 1, kind: input, shape index: {}]
  %s2 = inlined_call_operand.vmem [shape: f32[1,128], index: 2, kind: input, shape index: {}]
  %s3 = inlined_call_operand.hbm [shape: bf16[4,128], index: 3, kind: output, shape index: {}]
  %s4 = sld [smem:[#allocation0]]
  $region38: #{tpu_custom_call.1} parent=0
    _
  %s6 = ssub.s32 1, %s4
  %s7 = scalar_select 0, %s6, %s4
  $region1: #{tpu_custom_call.1} parent=0
    #allocation3 [shape = 'u8[4096]{0}', space=vmem, size = 0x1000, scoped, tag = 'input window, operand 0, single buffered']
    #allocation4 [shape = 's32[1]{0}', space=sflag, size = 0x4, scoped, tag = 'scoped memory for tpu_custom_call.1']
    #allocation5 [shape = 's32[1]{0}', space=sflag, size = 0x4, scoped, tag = 'scoped memory for tpu_custom_call.1']
    #allocation6 [shape = 'u8[16384]{0}', space=vmem, size = 0x4000, scoped, tag = 'input window, operand 1, single buffered']
    #allocation7 [shape = 's32[1]{0}', space=sflag, size = 0x4, scoped, tag = 'scoped memory for tpu_custom_call.1']
    #allocation8 [shape = 'u8[2048]{0}', space=vmem, size = 0x800, scoped, tag = 'output window, operand 0, single buffered']
    %8 = vsyncpa [#allocation4], 0
    %9 = vsyncpa [#allocation7], 0
    %10 = vsyncpa [#allocation5], 0
    // Predicated region
    $region2: #{tpu_custom_call.1} parent=1 // pred_check
      _
    $region3: #{tpu_custom_call.1} parent=1 // pred_check_branch
      %12 = sbr.rel (0) target = $region5
    $region4: #{tpu_custom_call.1} parent=1 // pred_region
      %s14 = ssub.s32 128, 64
      %15 = vsyncadd [#allocation4], %s14
      %s16 = sshll.u32 [#allocation3], 4
      %s17 = int_to_ptr.vmem [resolvable:$true] %s16
      %22 = dma.hbm_to_vmem [thread:$0]  %s0, 64, %s17, [#allocation4], 64, 64, 4
    $region5: #{tpu_custom_call.1} parent=1 // pred_fallthru
      _
    // Predicated region
    $region6: #{tpu_custom_call.1} parent=1 // pred_check
      _
    $region7: #{tpu_custom_call.1} parent=1 // pred_check_branch
      %24 = sbr.rel (0) target = $region9
    $region8: #{tpu_custom_call.1} parent=1 // pred_region
      %s26 = ssub.s32 512, 512
      %27 = vsyncadd [#allocation7], %s26
      %s28 = sshll.u32 [#allocation6], 4
      %s29 = int_to_ptr.vmem [resolvable:$true] %s28
      %34 = dma.hbm_to_vmem [thread:$0]  %s1, 512, %s29, [#allocation7], 64, 64, 4
    $region9: #{tpu_custom_call.1} parent=1 // pred_fallthru
      _
    // Predicated region
    $region10: #{tpu_custom_call.1} parent=1 // pred_check
      _
    $region11: #{tpu_custom_call.1} parent=1 // pred_check_branch
      %36 = sbr.rel (0) target = $region13
    $region12: #{tpu_custom_call.1} parent=1 // pred_region
      _
    $region13: #{tpu_custom_call.1} parent=1 // pred_fallthru
      _
    // Predicated region
    $region14: #{tpu_custom_call.1} parent=1 // pred_check
      _
    $region15: #{tpu_custom_call.1} parent=1 // pred_check_branch
      %38 = sbr.rel (0) target = $region17
    $region16: #{tpu_custom_call.1} parent=1 // pred_region
      %39 = dma.done [#allocation4], 128
    $region17: #{tpu_custom_call.1} parent=1 // pred_fallthru
      _
    // Predicated region
    $region18: #{tpu_custom_call.1} parent=1 // pred_check
      _
    $region19: #{tpu_custom_call.1} parent=1 // pred_check_branch
      %41 = sbr.rel (0) target = $region21
    $region20: #{tpu_custom_call.1} parent=1 // pred_region
      %42 = dma.done [#allocation7], 512
    $region21: #{tpu_custom_call.1} parent=1 // pred_fallthru
      _
    %p44 = scmp.eq.s32.totalorder 0, 0
    // Predicated region
    $region22: #{tpu_custom_call.1} parent=1 // pred_check
      %p45 = pneg %p44
    $region23: #{tpu_custom_call.1} parent=1 // pred_check_branch
      %47 = sbr.rel (%p45) target = $region25
    $region24: #{tpu_custom_call.1} parent=1 // pred_region
      %48 = vst [vmem:[#allocation2] sm:$0xff] 0.0
    $region25: #{tpu_custom_call.1} parent=1 // pred_fallthru
      _
    %v49 = vld [vmem:[#allocation3] sm:$0xff]
    %v50 = vpack.c.bf16 %v49, %v49
    %v51 = vld [vmem:[#allocation2] sm:$0xff]
    %v52 = vld [vmem:[#allocation6] sm:$0xf]
    %v53 = vld [vmem:[#allocation6 + $0x4] sm:$0xf]
    %v54 = vld [vmem:[#allocation6 + $0x8] sm:$0xf]
    %v55 = vld [vmem:[#allocation6 + $0xc] sm:$0xf]
    %v56 = vld [vmem:[#allocation6 + $0x10] sm:$0xf]
    %v57 = vld [vmem:[#allocation6 + $0x14] sm:$0xf]
    %v58 = vld [vmem:[#allocation6 + $0x18] sm:$0xf]
    %v59 = vld [vmem:[#allocation6 + $0x1c] sm:$0xf]
    %v68 = vunpack.c.l.b16 %v52
    %v69 = vunpack.c.l.b16 %v53
    %v70 = vunpack.c.l.b16 %v54
    %v71 = vunpack.c.l.b16 %v55
    %v72 = vunpack.c.l.b16 %v56
    %v73 = vunpack.c.l.b16 %v57
    %v74 = vunpack.c.l.b16 %v58
    %v75 = vunpack.c.l.b16 %v59
    %v76 = vpack.c.b16 %v69, %v68
    %v77 = vpack.c.b16 %v71, %v70
    %v78 = vpack.c.b16 %v73, %v72
    %v79 = vpack.c.b16 %v75, %v74
    %vm84 = vcmask 523264
    %v86 = vsel %vm84, %v50, 0
    %88 = vmatprep.subr.bf16.mxu0 0
    %89 = vmatpush1.bf16.msra.mxu0 %v76
    %90 = vmatprep.subr.bf16.mxu0 0
    %91 = vmatpush1.bf16.msra.mxu0 %v77
    %92 = vmatprep.subr.bf16.mxu0 0
    %93 = vmatpush1.bf16.msra.mxu0 %v78
    %94 = vmatprep.subr.bf16.mxu0 0
    %95 = vmatpush1.bf16.msra.mxu0 %v79
    %96 = vmatprep.subr.bf16.mxu0 0
    %97 = vmatpush1.bf16.msra.mxu0 0
    %98 = vmatprep.subr.bf16.mxu0 0
    %99 = vmatpush1.bf16.msra.mxu0 0
    %100 = vmatprep.subr.bf16.mxu0 0
    %101 = vmatpush1.bf16.msra.mxu0 0
    %102 = vmatprep.subr.bf16.mxu0 0
    %103 = vmatpush1.bf16.msra.mxu0 0
    %104 = vmatprep.subr.bf16.mxu0 0
    %105 = vmatpush1.bf16.msra.mxu0 0
    %106 = vmatprep.subr.bf16.mxu0 0
    %107 = vmatpush1.bf16.msra.mxu0 0
    %108 = vmatprep.subr.bf16.mxu0 0
    %109 = vmatpush1.bf16.msra.mxu0 0
    %110 = vmatprep.subr.bf16.mxu0 0
    %111 = vmatpush1.bf16.msra.mxu0 0
    %112 = vmatprep.subr.bf16.mxu0 0
    %113 = vmatpush1.bf16.msra.mxu0 0
    %114 = vmatprep.subr.bf16.mxu0 0
    %115 = vmatpush1.bf16.msra.mxu0 0
    %116 = vmatprep.subr.bf16.mxu0 0
    %117 = vmatpush1.bf16.msra.mxu0 0
    %118 = vmatprep.subr.bf16.mxu0 0
    %119 = vmatpush1.bf16.msra.mxu0 0
    %120 = vmatprep.mubr.bf16.mxu0 0
    %121 = vmatmul.mubr.bf16.gmra.mrb[0].mxu0 %v86
    %v122 = vpop.f32.mrb[0].mxu0
    %v123 = vadd.f32 0.0, %v122
    %v124 = vpop.f32.mrb[0].mxu0
    %v125 = vpop.f32.mrb[0].mxu0
    %v126 = vpop.f32.mrb[0].mxu0
    %127 = vdwg.mxu0
    %v128 = vadd.f32 %v51, %v123
    %129 = vst [vmem:[#allocation2] sm:$0xff] %v128
    // Predicated region
    $region26: #{tpu_custom_call.1} parent=1 // pred_check
      %p130 = pneg %p44
    $region27: #{tpu_custom_call.1} parent=1 // pred_check_branch
      %132 = sbr.rel (%p130) target = $region29
    $region28: #{tpu_custom_call.1} parent=1 // pred_region
      %v133 = vld [vmem:[#allocation2] sm:$0xff]
      %v134 = vld [vmem:[%s2] sm:$0x1]
      %v136 = vlaneseq
      %v137 = vshrl.u32 %v136, 7
      %v138 = vsub.s32 0, %v137
      %v139 = vrot.slane %v134, %v138
      %v141 = vadd.f32 %v133, %v139
      %v142 = vpack.c.bf16 %v141, %v141
      %v145 = vunpack.c.l.s4 1983009808
      %v146 = vunpack.c.0.s8 %v145
      %v147 = vlaneseq
      %v148 = vshrl.u32 %v147, 7
      %v149 = vsub.s32 %v146, %v148
      %v150 = vrot.slane %v142, %v149
      %v151 = vcombine.high %v150, %v150
      %154 = vst [vmem:[#allocation8] sm:$0x3] %v150
      %155 = vst [vmem:[#allocation8 + $0x2] sm:$0x3] %v151
    $region29: #{tpu_custom_call.1} parent=1 // pred_fallthru
      _
    // Predicated region
    $region30: #{tpu_custom_call.1} parent=1 // pred_check
      _
    $region31: #{tpu_custom_call.1} parent=1 // pred_check_branch
      %157 = sbr.rel (0) target = $region33
    $region32: #{tpu_custom_call.1} parent=1 // pred_region
      %s159 = ssub.s32 64, 32
      %160 = vsyncadd [#allocation5], %s159
      %s161 = sshll.u32 [#allocation8], 4
      %s162 = int_to_ptr.vmem [resolvable:$true] %s161
      %167 = dma.vmem_to_hbm [thread:$0]  %s162, 32, %s3, [#allocation5], 32, 32, 2
    $region33: #{tpu_custom_call.1} parent=1 // pred_fallthru
      _
    // Predicated region
    $region34: #{tpu_custom_call.1} parent=1 // pred_check
      _
    $region35: #{tpu_custom_call.1} parent=1 // pred_check_branch
      %169 = sbr.rel (0) target = $region37
    $region36: #{tpu_custom_call.1} parent=1 // pred_region
      %170 = dma.done [#allocation5], 64
    $region37: #{tpu_custom_call.1} parent=1 // pred_fallthru
      _
    %171 = vsyncpa [#allocation4], 1
    %172 = vsyncpa [#allocation7], 1
    %173 = vsyncpa [#allocation5], 1

</llo_original>
